<compile_context>
chip_gen: v6e
topology: v6e:2x2x1
jax: 0.10.0
libtpu: 0.0.40
codegen_flags: <defaults>
</compile_context>

<pallas_src>
import jax
import jax.numpy as jnp
from jax import lax
from jax.experimental import pallas as pl
from jax.experimental.pallas import tpu as pltpu


def _round_up(x: int, m: int) -> int:
    return (x + m - 1) // m * m


def _gelu_tanh(h):
    # TODO(synk): PyTorch nn.GELU() default is the exact erf form; the tanh
    # approximation is used so the kernel lowers cleanly to the EUP on all TPU
    # generations (max abs deviation ~3e-3).
    c = 0.7978845608028654  # sqrt(2/pi)
    return 0.5 * h * (1.0 + jnp.tanh(c * (h + 0.044715 * h * h * h)))


def _linear_pt(h, w, b):
    # h @ w.T + b with w kept in PyTorch (out_features, in_features) layout.
    # The MXU handles the transposed contraction natively; no materialized transpose.
    y = lax.dot_general(h, w, (((1,), (1,)), ((), ())),
                        preferred_element_type=jnp.float32)
    return y + b


def dense_skip_head_kernel(x_ref, w_in_ref, b_in_ref, w_hid_ref, b_hid_ref,
                           w_out_ref, b_out_ref, o_ref):
    x = x_ref[...].astype(jnp.float32)

    h = _gelu_tanh(_linear_pt(x, w_in_ref[...], b_in_ref[...]))

    for l in range(w_hid_ref.shape[0]):          # static, small (default 3)
        h = h + _gelu_tanh(_linear_pt(h, w_hid_ref[l], b_hid_ref[l]))

    logits = _linear_pt(h, w_out_ref[...], b_out_ref[...])

    # numerically-stable softmax over dim=1 (last axis); padded lanes carry a
    # -inf bias -> exp() == 0, so they never perturb the denominator.
    m = jnp.max(logits, axis=-1, keepdims=True)
    e = jnp.exp(logits - m)
    denom = jnp.sum(e, axis=-1, keepdims=True)
    o_ref[...] = (e * pl.reciprocal(denom, approx=True)).astype(o_ref.dtype)


def prepare_params(w_in, b_in, w_hids, b_hids, w_out, b_out):
    """One-time parameter packing (done at init, NOT per forward call)."""
    hidden = w_in.shape[0]
    d_out = w_out.shape[0]
    out_pad = _round_up(d_out, 128)              # lane-dense output width
    n_hid = len(w_hids)

    w_out_p = jnp.zeros((out_pad, w_out.shape[1]), w_out.dtype).at[:d_out].set(w_out)
    b_out_p = jnp.full((1, out_pad), -jnp.inf, b_out.dtype).at[0, :d_out].set(b_out)

    return {
        "w_in": w_in,                                        # (H, D_in)  PyTorch layout
        "b_in": b_in.reshape(1, hidden),                     # (1, H)
        "w_hid": jnp.stack(list(w_hids)),                    # (L, H, H)
        "b_hid": jnp.stack(list(b_hids)).reshape(n_hid, 1, hidden),  # (L, 1, H)
        "w_out": w_out_p,                                    # (OUT_PAD, H) zero-padded rows
        "b_out": b_out_p,                                    # (1, OUT_PAD) -inf padded lanes
        "d_out": d_out,
    }


def dense_skip_head_forward(x, params, *, tile_b=256):
    B, d_in = x.shape
    hidden = params["w_in"].shape[0]
    out_pad = params["w_out"].shape[0]
    n_hid = params["w_hid"].shape[0]

    tile = min(tile_b, _round_up(B, 8))
    b_pad = _round_up(B, tile)
    x_p = jnp.pad(x, ((0, b_pad - B), (0, 0))) if b_pad != B else x
    grid = (b_pad // tile,)

    # VMEM budget: resident params + double-buffered x/out tiles + headroom for
    # intermediates/compiler scratch. (Sized so it is safe on v5e/v6e/v7x.)
    resident = 4 * sum(int(params[k].size) for k in
                       ("w_in", "b_in", "w_hid", "b_hid", "w_out", "b_out"))
    per_tile = 4 * tile * (d_in + out_pad + 4 * hidden)
    vmem_limit = int(resident + 2 * per_tile + (16 << 20))

    out = pl.pallas_call(
        dense_skip_head_kernel,
        out_shape=jax.ShapeDtypeStruct((b_pad, out_pad), x.dtype),
        grid=grid,
        in_specs=[
            pl.BlockSpec((tile, d_in), lambda i: (i, 0)),          # x: tiled over batch
            pl.BlockSpec((hidden, d_in), lambda i: (0, 0)),        # resident params below
            pl.BlockSpec((1, hidden), lambda i: (0, 0)),
            pl.BlockSpec((n_hid, hidden, hidden), lambda i: (0, 0, 0)),
            pl.BlockSpec((n_hid, 1, hidden), lambda i: (0, 0, 0)),
            pl.BlockSpec((out_pad, hidden), lambda i: (0, 0)),
            pl.BlockSpec((1, out_pad), lambda i: (0, 0)),
        ],
        out_specs=pl.BlockSpec((tile, out_pad), lambda i: (i, 0)),
        compiler_params=pltpu.CompilerParams(
            dimension_semantics=("parallel",),
            vmem_limit_bytes=vmem_limit),
    )(x_p, params["w_in"], params["b_in"], params["w_hid"], params["b_hid"],
      params["w_out"], params["b_out"])

    return out[:B, :params["d_out"]]


if __name__ == "__main__":
    # Small shapes consistent with the module (hidden_dims / no_hidden_layers defaults).
    batch, input_dims, output_dims = 8, 32, 16
    hidden_dims, no_hidden_layers = 200, 3

    def linear_init(k, fan_out, fan_in):
        # nn.Linear default init: U(-1/sqrt(fan_in), 1/sqrt(fan_in))
        kw, kb = jax.random.split(k)
        bound = 1.0 / (fan_in ** 0.5)
        w = jax.random.uniform(kw, (fan_out, fan_in), jnp.float32, -bound, bound)
        b = jax.random.uniform(kb, (fan_out,), jnp.float32, -bound, bound)
        return w, b

    key = jax.random.PRNGKey(0)
    kx, k_in, k_out, *k_hid = jax.random.split(key, 3 + no_hidden_layers)

    x = jax.random.normal(kx, (batch, input_dims), jnp.float32)
    w_in, b_in = linear_init(k_in, hidden_dims, input_dims)
    hid = [linear_init(k, hidden_dims, hidden_dims) for k in k_hid]
    w_hids, b_hids = zip(*hid)
    w_out, b_out = linear_init(k_out, output_dims, hidden_dims)

    params = prepare_params(w_in, b_in, w_hids, b_hids, w_out, b_out)

    out = dense_skip_head_forward(x, params)
    out = jax.block_until_ready(out)

    # Pure-JAX reference (same tanh-GELU approximation as the kernel).
    h = _gelu_tanh(x @ w_in.T + b_in)
    for w, b in zip(w_hids, b_hids):
        h = h + _gelu_tanh(h @ w.T + b)
    ref = jax.nn.softmax(h @ w_out.T + b_out, axis=1)

    assert out.shape == (batch, output_dims)
    assert jnp.allclose(out, ref, atol=1e-3, rtol=1e-3), \
        float(jnp.max(jnp.abs(out - ref)))
    assert jnp.allclose(jnp.sum(out, axis=1), 1.0, atol=5e-3)

    print("KERNEL_OK")
</pallas_src>

<mosaic_0001>
module attributes {stable_mosaic.version = 11 : i64} {
  func.func @dense_skip_head_kernel(%arg0: i32, %arg1: memref<8x32xf32, #tpu.memory_space<vmem>>, %arg2: memref<200x32xf32, #tpu.memory_space<vmem>>, %arg3: memref<1x200xf32, #tpu.memory_space<vmem>>, %arg4: memref<3x200x200xf32, #tpu.memory_space<vmem>>, %arg5: memref<3x1x200xf32, #tpu.memory_space<vmem>>, %arg6: memref<128x200xf32, #tpu.memory_space<vmem>>, %arg7: memref<1x128xf32, #tpu.memory_space<vmem>>, %arg8: memref<8x128xf32, #tpu.memory_space<vmem>>) attributes {dimension_semantics = [#tpu.dimension_semantics<parallel>], iteration_bounds = array<i64: 1>, scalar_prefetch = 0 : i64, scratch_operands = 0 : i64, tpu.core_type = #tpu.core_type<tc>, window_params = [{transform_indices = @transform_0, window_bounds = array<i64: 8, 32>}, {pipeline_mode = #tpu.pipeline_mode<synchronous>, transform_indices = @transform_1, window_bounds = array<i64: 200, 32>}, {pipeline_mode = #tpu.pipeline_mode<synchronous>, transform_indices = @transform_2, window_bounds = array<i64: 1, 200>}, {pipeline_mode = #tpu.pipeline_mode<synchronous>, transform_indices = @transform_3, window_bounds = array<i64: 3, 200, 200>}, {pipeline_mode = #tpu.pipeline_mode<synchronous>, transform_indices = @transform_4, window_bounds = array<i64: 3, 1, 200>}, {pipeline_mode = #tpu.pipeline_mode<synchronous>, transform_indices = @transform_5, window_bounds = array<i64: 128, 200>}, {pipeline_mode = #tpu.pipeline_mode<synchronous>, transform_indices = @transform_6, window_bounds = array<i64: 1, 128>}, {transform_indices = @transform_7, window_bounds = array<i64: 8, 128>}]} {
    %c0 = arith.constant 0 : index
    %c0_0 = arith.constant 0 : index
    %0 = vector.load %arg1[%c0, %c0_0] : memref<8x32xf32, #tpu.memory_space<vmem>>, vector<8x32xf32>
    %c0_1 = arith.constant 0 : index
    %c0_2 = arith.constant 0 : index
    %1 = vector.load %arg2[%c0_1, %c0_2] : memref<200x32xf32, #tpu.memory_space<vmem>>, vector<200x32xf32>
    %c0_3 = arith.constant 0 : index
    %c0_4 = arith.constant 0 : index
    %2 = vector.load %arg3[%c0_3, %c0_4] : memref<1x200xf32, #tpu.memory_space<vmem>>, vector<1x200xf32>
    %cst = arith.constant dense<0.000000e+00> : vector<8x200xf32>
    %3 = tpu.matmul %0, %1, %cst {dimension_numbers = #tpu.dot_dimension_numbers<[1], [1], [0], [0], [0, 0, 1, 0], [], []>} : vector<8x32xf32>, vector<200x32xf32>, vector<8x200xf32> -> vector<8x200xf32>
    %4 = vector.broadcast %2 : vector<1x200xf32> to vector<8x200xf32>
    %5 = arith.addf %3, %4 : vector<8x200xf32>
    %cst_5 = arith.constant 5.000000e-01 : f32
    %6 = vector.broadcast %cst_5 : f32 to vector<8x200xf32>
    %7 = arith.mulf %6, %5 : vector<8x200xf32>
    %cst_6 = arith.constant 4.471500e-02 : f32
    %8 = vector.broadcast %cst_6 : f32 to vector<8x200xf32>
    %9 = arith.mulf %8, %5 : vector<8x200xf32>
    %10 = arith.mulf %9, %5 : vector<8x200xf32>
    %11 = arith.mulf %10, %5 : vector<8x200xf32>
    %12 = arith.addf %5, %11 : vector<8x200xf32>
    %cst_7 = arith.constant 0.797884583 : f32
    %13 = vector.broadcast %cst_7 : f32 to vector<8x200xf32>
    %14 = arith.mulf %13, %12 : vector<8x200xf32>
    %15 = math.tanh %14 : vector<8x200xf32>
    %cst_8 = arith.constant 1.000000e+00 : f32
    %16 = vector.broadcast %cst_8 : f32 to vector<8x200xf32>
    %17 = arith.addf %16, %15 : vector<8x200xf32>
    %18 = arith.mulf %7, %17 : vector<8x200xf32>
    %c0_9 = arith.constant 0 : index
    %c0_10 = arith.constant 0 : index
    %c0_11 = arith.constant 0 : index
    %19 = vector.load %arg4[%c0_9, %c0_10, %c0_11] : memref<3x200x200xf32, #tpu.memory_space<vmem>>, vector<1x200x200xf32>
    %20 = vector.shape_cast %19 : vector<1x200x200xf32> to vector<200x200xf32>
    %c0_12 = arith.constant 0 : index
    %c0_13 = arith.constant 0 : index
    %c0_14 = arith.constant 0 : index
    %21 = vector.load %arg5[%c0_12, %c0_13, %c0_14] : memref<3x1x200xf32, #tpu.memory_space<vmem>>, vector<1x1x200xf32>
    %22 = vector.shape_cast %21 : vector<1x1x200xf32> to vector<1x200xf32>
    %cst_15 = arith.constant dense<0.000000e+00> : vector<8x200xf32>
    %23 = tpu.matmul %18, %20, %cst_15 {dimension_numbers = #tpu.dot_dimension_numbers<[1], [1], [0], [0], [0, 0, 1, 0], [], []>} : vector<8x200xf32>, vector<200x200xf32>, vector<8x200xf32> -> vector<8x200xf32>
    %24 = vector.broadcast %22 : vector<1x200xf32> to vector<8x200xf32>
    %25 = arith.addf %23, %24 : vector<8x200xf32>
    %cst_16 = arith.constant 5.000000e-01 : f32
    %26 = vector.broadcast %cst_16 : f32 to vector<8x200xf32>
    %27 = arith.mulf %26, %25 : vector<8x200xf32>
    %cst_17 = arith.constant 4.471500e-02 : f32
    %28 = vector.broadcast %cst_17 : f32 to vector<8x200xf32>
    %29 = arith.mulf %28, %25 : vector<8x200xf32>
    %30 = arith.mulf %29, %25 : vector<8x200xf32>
    %31 = arith.mulf %30, %25 : vector<8x200xf32>
    %32 = arith.addf %25, %31 : vector<8x200xf32>
    %cst_18 = arith.constant 0.797884583 : f32
    %33 = vector.broadcast %cst_18 : f32 to vector<8x200xf32>
    %34 = arith.mulf %33, %32 : vector<8x200xf32>
    %35 = math.tanh %34 : vector<8x200xf32>
    %cst_19 = arith.constant 1.000000e+00 : f32
    %36 = vector.broadcast %cst_19 : f32 to vector<8x200xf32>
    %37 = arith.addf %36, %35 : vector<8x200xf32>
    %38 = arith.mulf %27, %37 : vector<8x200xf32>
    %39 = arith.addf %18, %38 : vector<8x200xf32>
    %c1 = arith.constant 1 : index
    %c0_20 = arith.constant 0 : index
    %c0_21 = arith.constant 0 : index
    %40 = vector.load %arg4[%c1, %c0_20, %c0_21] : memref<3x200x200xf32, #tpu.memory_space<vmem>>, vector<1x200x200xf32>
    %41 = vector.shape_cast %40 : vector<1x200x200xf32> to vector<200x200xf32>
    %c1_22 = arith.constant 1 : index
    %c0_23 = arith.constant 0 : index
    %c0_24 = arith.constant 0 : index
    %42 = vector.load %arg5[%c1_22, %c0_23, %c0_24] : memref<3x1x200xf32, #tpu.memory_space<vmem>>, vector<1x1x200xf32>
    %43 = vector.shape_cast %42 : vector<1x1x200xf32> to vector<1x200xf32>
    %cst_25 = arith.constant dense<0.000000e+00> : vector<8x200xf32>
    %44 = tpu.matmul %39, %41, %cst_25 {dimension_numbers = #tpu.dot_dimension_numbers<[1], [1], [0], [0], [0, 0, 1, 0], [], []>} : vector<8x200xf32>, vector<200x200xf32>, vector<8x200xf32> -> vector<8x200xf32>
    %45 = vector.broadcast %43 : vector<1x200xf32> to vector<8x200xf32>
    %46 = arith.addf %44, %45 : vector<8x200xf32>
    %cst_26 = arith.constant 5.000000e-01 : f32
    %47 = vector.broadcast %cst_26 : f32 to vector<8x200xf32>
    %48 = arith.mulf %47, %46 : vector<8x200xf32>
    %cst_27 = arith.constant 4.471500e-02 : f32
    %49 = vector.broadcast %cst_27 : f32 to vector<8x200xf32>
    %50 = arith.mulf %49, %46 : vector<8x200xf32>
    %51 = arith.mulf %50, %46 : vector<8x200xf32>
    %52 = arith.mulf %51, %46 : vector<8x200xf32>
    %53 = arith.addf %46, %52 : vector<8x200xf32>
    %cst_28 = arith.constant 0.797884583 : f32
    %54 = vector.broadcast %cst_28 : f32 to vector<8x200xf32>
    %55 = arith.mulf %54, %53 : vector<8x200xf32>
    %56 = math.tanh %55 : vector<8x200xf32>
    %cst_29 = arith.constant 1.000000e+00 : f32
    %57 = vector.broadcast %cst_29 : f32 to vector<8x200xf32>
    %58 = arith.addf %57, %56 : vector<8x200xf32>
    %59 = arith.mulf %48, %58 : vector<8x200xf32>
    %60 = arith.addf %39, %59 : vector<8x200xf32>
    %c2 = arith.constant 2 : index
    %c0_30 = arith.constant 0 : index
    %c0_31 = arith.constant 0 : index
    %61 = vector.load %arg4[%c2, %c0_30, %c0_31] : memref<3x200x200xf32, #tpu.memory_space<vmem>>, vector<1x200x200xf32>
    %62 = vector.shape_cast %61 : vector<1x200x200xf32> to vector<200x200xf32>
    %c2_32 = arith.constant 2 : index
    %c0_33 = arith.constant 0 : index
    %c0_34 = arith.constant 0 : index
    %63 = vector.load %arg5[%c2_32, %c0_33, %c0_34] : memref<3x1x200xf32, #tpu.memory_space<vmem>>, vector<1x1x200xf32>
    %64 = vector.shape_cast %63 : vector<1x1x200xf32> to vector<1x200xf32>
    %cst_35 = arith.constant dense<0.000000e+00> : vector<8x200xf32>
    %65 = tpu.matmul %60, %62, %cst_35 {dimension_numbers = #tpu.dot_dimension_numbers<[1], [1], [0], [0], [0, 0, 1, 0], [], []>} : vector<8x200xf32>, vector<200x200xf32>, vector<8x200xf32> -> vector<8x200xf32>
    %66 = vector.broadcast %64 : vector<1x200xf32> to vector<8x200xf32>
    %67 = arith.addf %65, %66 : vector<8x200xf32>
    %cst_36 = arith.constant 5.000000e-01 : f32
    %68 = vector.broadcast %cst_36 : f32 to vector<8x200xf32>
    %69 = arith.mulf %68, %67 : vector<8x200xf32>
    %cst_37 = arith.constant 4.471500e-02 : f32
    %70 = vector.broadcast %cst_37 : f32 to vector<8x200xf32>
    %71 = arith.mulf %70, %67 : vector<8x200xf32>
    %72 = arith.mulf %71, %67 : vector<8x200xf32>
    %73 = arith.mulf %72, %67 : vector<8x200xf32>
    %74 = arith.addf %67, %73 : vector<8x200xf32>
    %cst_38 = arith.constant 0.797884583 : f32
    %75 = vector.broadcast %cst_38 : f32 to vector<8x200xf32>
    %76 = arith.mulf %75, %74 : vector<8x200xf32>
    %77 = math.tanh %76 : vector<8x200xf32>
    %cst_39 = arith.constant 1.000000e+00 : f32
    %78 = vector.broadcast %cst_39 : f32 to vector<8x200xf32>
    %79 = arith.addf %78, %77 : vector<8x200xf32>
    %80 = arith.mulf %69, %79 : vector<8x200xf32>
    %81 = arith.addf %60, %80 : vector<8x200xf32>
    %c0_40 = arith.constant 0 : index
    %c0_41 = arith.constant 0 : index
    %82 = vector.load %arg6[%c0_40, %c0_41] : memref<128x200xf32, #tpu.memory_space<vmem>>, vector<128x200xf32>
    %c0_42 = arith.constant 0 : index
    %c0_43 = arith.constant 0 : index
    %83 = vector.load %arg7[%c0_42, %c0_43] : memref<1x128xf32, #tpu.memory_space<vmem>>, vector<1x128xf32>
    %cst_44 = arith.constant dense<0.000000e+00> : vector<8x128xf32>
    %84 = tpu.matmul %81, %82, %cst_44 {dimension_numbers = #tpu.dot_dimension_numbers<[1], [1], [0], [0], [0, 0, 1, 0], [], []>} : vector<8x200xf32>, vector<128x200xf32>, vector<8x128xf32> -> vector<8x128xf32>
    %85 = vector.broadcast %83 : vector<1x128xf32> to vector<8x128xf32>
    %86 = arith.addf %84, %85 : vector<8x128xf32>
    %cst_45 = arith.constant dense<0xFF800000> : vector<8xf32>
    %87 = vector.multi_reduction <maximumf>, %86, %cst_45 [1] : vector<8x128xf32> to vector<8xf32>
    %88 = vector.shape_cast %87 : vector<8xf32> to vector<8x1xf32>
    %89 = vector.broadcast %88 : vector<8x1xf32> to vector<8x128xf32>
    %90 = arith.subf %86, %89 : vector<8x128xf32>
    %91 = math.exp %90 : vector<8x128xf32>
    %cst_46 = arith.constant dense<0.000000e+00> : vector<8xf32>
    %92 = vector.multi_reduction <add>, %91, %cst_46 [1] : vector<8x128xf32> to vector<8xf32>
    %93 = vector.shape_cast %92 : vector<8xf32> to vector<8x1xf32>
    %94 = tpu.reciprocal %93 {approx = true} : vector<8x1xf32> -> vector<8x1xf32>
    %95 = vector.broadcast %94 : vector<8x1xf32> to vector<8x128xf32>
    %96 = arith.mulf %91, %95 : vector<8x128xf32>
    %c0_47 = arith.constant 0 : index
    %c0_48 = arith.constant 0 : index
    %97 = vector.load %arg8[%c0_47, %c0_48] : memref<8x128xf32, #tpu.memory_space<vmem>>, vector<8x128xf32>
    tpu.vector_store %arg8[%c0_47, %c0_48], %96 {strides = array<i32>} : memref<8x128xf32, #tpu.memory_space<vmem>>, vector<8x128xf32>,
    return
  }
  func.func @transform_0(%arg0: i32) -> (i32, i32) {
    %c0_i32 = arith.constant 0 : i32
    %c0_i32_0 = arith.constant 0 : i32
    return %arg0, %c0_i32 : i32, i32
  }
  func.func @transform_1(%arg0: i32) -> (i32, i32) {
    %c0_i32 = arith.constant 0 : i32
    %c0_i32_0 = arith.constant 0 : i32
    %c0_i32_1 = arith.constant 0 : i32
    return %c0_i32, %c0_i32_0 : i32, i32
  }
  func.func @transform_2(%arg0: i32) -> (i32, i32) {
    %c0_i32 = arith.constant 0 : i32
    %c0_i32_0 = arith.constant 0 : i32
    %c0_i32_1 = arith.constant 0 : i32
    return %c0_i32, %c0_i32_0 : i32, i32
  }
  func.func @transform_3(%arg0: i32) -> (i32, i32, i32) {
    %c0_i32 = arith.constant 0 : i32
    %c0_i32_0 = arith.constant 0 : i32
    %c0_i32_1 = arith.constant 0 : i32
    %c0_i32_2 = arith.constant 0 : i32
    return %c0_i32, %c0_i32_0, %c0_i32_1 : i32, i32, i32
  }
  func.func @transform_4(%arg0: i32) -> (i32, i32, i32) {
    %c0_i32 = arith.constant 0 : i32
    %c0_i32_0 = arith.constant 0 : i32
    %c0_i32_1 = arith.constant 0 : i32
    %c0_i32_2 = arith.constant 0 : i32
    return %c0_i32, %c0_i32_0, %c0_i32_1 : i32, i32, i32
  }
  func.func @transform_5(%arg0: i32) -> (i32, i32) {
    %c0_i32 = arith.constant 0 : i32
    %c0_i32_0 = arith.constant 0 : i32
    %c0_i32_1 = arith.constant 0 : i32
    return %c0_i32, %c0_i32_0 : i32, i32
  }
  func.func @transform_6(%arg0: i32) -> (i32, i32) {
    %c0_i32 = arith.constant 0 : i32
    %c0_i32_0 = arith.constant 0 : i32
    %c0_i32_1 = arith.constant 0 : i32
    return %c0_i32, %c0_i32_0 : i32, i32
  }
  func.func @transform_7(%arg0: i32) -> (i32, i32) {
    %c0_i32 = arith.constant 0 : i32
    %c0_i32_0 = arith.constant 0 : i32
    return %arg0, %c0_i32 : i32, i32
  }
}

</mosaic_0001>

<llo_original>
// kernel: tpu_custom_call.1
$region0: #{tpu_custom_call.1}
  #allocation0 [shape = 'u32[]', space=smem, size = 0x4, offset = 0x4, fixed_abs, tag = 'smem constant byte address 0x4 - core index']
  #allocation1 [shape = 'u32[144,128]{1,0:T(1,128)}', space=vmem, size = 0x12000, scoped, tag = 'internal scratch']
  %s0 = inlined_call_operand.vmem [shape: f32[8,32], index: 0, kind: input, shape index: {}]
  %s1 = inlined_call_operand.vmem [shape: f32[200,32], index: 1, kind: input, shape index: {}]
  %s2 = inlined_call_operand.vmem [shape: f32[1,200], index: 2, kind: input, shape index: {}]
  %s3 = inlined_call_operand.hbm [shape: f32[3,200,200], index: 3, kind: input, shape index: {}]
  %s4 = inlined_call_operand.vmem [shape: f32[3,1,200], index: 4, kind: input, shape index: {}]
  %s5 = inlined_call_operand.vmem [shape: f32[128,200], index: 5, kind: input, shape index: {}]
  %s6 = inlined_call_operand.vmem [shape: f32[1,128], index: 6, kind: input, shape index: {}]
  %s7 = inlined_call_operand.hbm [shape: f32[8,128], index: 7, kind: output, shape index: {}]
  %s8 = sld [smem:[#allocation0]]
  $region42: #{tpu_custom_call.1} parent=0
    _
  %s10 = ssub.s32 1, %s8
  %s11 = scalar_select 0, %s10, %s8
  $region1: #{tpu_custom_call.1} parent=0
    #allocation2 [shape = 'u8[614400]{0}', space=vmem, size = 0x96000, scoped, tag = 'input window, operand 3, single buffered']
    #allocation3 [shape = 's32[1]{0}', space=sflag, size = 0x4, scoped, tag = 'scoped memory for tpu_custom_call.1']
    #allocation4 [shape = 's32[1]{0}', space=sflag, size = 0x4, scoped, tag = 'scoped memory for tpu_custom_call.1']
    #allocation5 [shape = 'u8[4096]{0}', space=vmem, size = 0x1000, scoped, tag = 'output window, operand 0, single buffered']
    %12 = vsyncpa [#allocation3], 0
    %13 = vsyncpa [#allocation4], 0
    // Predicated region
    $region2: #{tpu_custom_call.1} parent=1 // pred_check
      _
    $region3: #{tpu_custom_call.1} parent=1 // pred_check_branch
      %15 = sbr.rel (0) target = $region5
    $region4: #{tpu_custom_call.1} parent=1 // pred_region
      _
    $region5: #{tpu_custom_call.1} parent=1 // pred_fallthru
      _
    // Predicated region
    $region6: #{tpu_custom_call.1} parent=1 // pred_check
      _
    $region7: #{tpu_custom_call.1} parent=1 // pred_check_branch
      %17 = sbr.rel (0) target = $region9
    $region8: #{tpu_custom_call.1} parent=1 // pred_region
      _
    $region9: #{tpu_custom_call.1} parent=1 // pred_fallthru
      _
    // Predicated region
    $region10: #{tpu_custom_call.1} parent=1 // pred_check
      _
    $region11: #{tpu_custom_call.1} parent=1 // pred_check_branch
      %19 = sbr.rel (0) target = $region13
    $region12: #{tpu_custom_call.1} parent=1 // pred_region
      _
    $region13: #{tpu_custom_call.1} parent=1 // pred_fallthru
      _
    // Predicated region
    $region14: #{tpu_custom_call.1} parent=1 // pred_check
      _
    $region15: #{tpu_custom_call.1} parent=1 // pred_check_branch
      %21 = sbr.rel (0) target = $region17
    $region16: #{tpu_custom_call.1} parent=1 // pred_region
      %s23 = ssub.s32 19200, 19200
      %24 = vsyncadd [#allocation3], %s23
      %s25 = sshll.u32 [#allocation2], 4
      %s26 = int_to_ptr.vmem [resolvable:$true] %s25
      %31 = dma.hbm_to_vmem [thread:$0]  %s3, 19200, %s26, [#allocation3], 256, 256, 16
    $region17: #{tpu_custom_call.1} parent=1 // pred_fallthru
      _
    // Predicated region
    $region18: #{tpu_custom_call.1} parent=1 // pred_check
      _
    $region19: #{tpu_custom_call.1} parent=1 // pred_check_branch
      %33 = sbr.rel (0) target = $region21
    $region20: #{tpu_custom_call.1} parent=1 // pred_region
      _
    $region21: #{tpu_custom_call.1} parent=1 // pred_fallthru
      _
    // Predicated region
    $region22: #{tpu_custom_call.1} parent=1 // pred_check
      _
    $region23: #{tpu_custom_call.1} parent=1 // pred_check_branch
      %35 = sbr.rel (0) target = $region25
    $region24: #{tpu_custom_call.1} parent=1 // pred_region
      _
    $region25: #{tpu_custom_call.1} parent=1 // pred_fallthru
      _
    // Predicated region
    $region26: #{tpu_custom_call.1} parent=1 // pred_check
      _
    $region27: #{tpu_custom_call.1} parent=1 // pred_check_branch
      %37 = sbr.rel (0) target = $region29
    $region28: #{tpu_custom_call.1} parent=1 // pred_region
      _
    $region29: #{tpu_custom_call.1} parent=1 // pred_fallthru
      _
    // Predicated region
    $region30: #{tpu_custom_call.1} parent=1 // pred_check
      _
    $region31: #{tpu_custom_call.1} parent=1 // pred_check_branch
      %39 = sbr.rel (0) target = $region33
    $region32: #{tpu_custom_call.1} parent=1 // pred_region
      %40 = dma.done [#allocation3], 19200
    $region33: #{tpu_custom_call.1} parent=1 // pred_fallthru
      _
    %v41 = vld [vmem:[%s0] sm:$0xff]
    %v42 = vld [vmem:[%s1] sm:$0xff]
    %v43 = vld [vmem:[%s1 + $0x8] sm:$0xff]
    %v44 = vld [vmem:[%s1 + $0x10] sm:$0xff]
    %v45 = vld [vmem:[%s1 + $0x18] sm:$0xff]
    %v46 = vld [vmem:[%s1 + $0x20] sm:$0xff]
    %v47 = vld [vmem:[%s1 + $0x28] sm:$0xff]
    %v48 = vld [vmem:[%s1 + $0x30] sm:$0xff]
    %v49 = vld [vmem:[%s1 + $0x38] sm:$0xff]
    %v50 = vld [vmem:[%s1 + $0x40] sm:$0xff]
    %v51 = vld [vmem:[%s1 + $0x48] sm:$0xff]
    %v52 = vld [vmem:[%s1 + $0x50] sm:$0xff]
    %v53 = vld [vmem:[%s1 + $0x58] sm:$0xff]
    %v54 = vld [vmem:[%s1 + $0x60] sm:$0xff]
    %v55 = vld [vmem:[%s1 + $0x68] sm:$0xff]
    %v56 = vld [vmem:[%s1 + $0x70] sm:$0xff]
    %v57 = vld [vmem:[%s1 + $0x78] sm:$0xff]
    %v58 = vld [vmem:[%s1 + $0x80] sm:$0xff]
    %v59 = vld [vmem:[%s1 + $0x88] sm:$0xff]
    %v60 = vld [vmem:[%s1 + $0x90] sm:$0xff]
    %v61 = vld [vmem:[%s1 + $0x98] sm:$0xff]
    %v62 = vld [vmem:[%s1 + $0xa0] sm:$0xff]
    %v63 = vld [vmem:[%s1 + $0xa8] sm:$0xff]
    %v64 = vld [vmem:[%s1 + $0xb0] sm:$0xff]
    %v65 = vld [vmem:[%s1 + $0xb8] sm:$0xff]
    %v66 = vld [vmem:[%s1 + $0xc0] sm:$0xff]
    %v67 = vld [vmem:[%s2] sm:$0x3]
    %v69 = vlaneseq
    %v70 = vshrl.u32 %v69, 7
    %v71 = vsub.s32 0, %v70
    %v72 = vrot.slane %v67, %v71
    %v73 = vlaneseq
    %v74 = vshrl.u32 %v73, 7
    %v75 = vsub.s32 1, %v74
    %v76 = vrot.slane %v67, %v75
    %vm79 = vcmask 261120
    %v81 = vsel %vm79, %v41, 0
    %v84 = vsel %vm79, %v42, 0
    %v87 = vsel %vm79, %v43, 0
    %v90 = vsel %vm79, %v44, 0
    %v93 = vsel %vm79, %v45, 0
    %v96 = vsel %vm79, %v46, 0
    %v99 = vsel %vm79, %v47, 0
    %v102 = vsel %vm79, %v48, 0
    %v105 = vsel %vm79, %v49, 0
    %v108 = vsel %vm79, %v50, 0
    %v111 = vsel %vm79, %v51, 0
    %v114 = vsel %vm79, %v52, 0
    %v117 = vsel %vm79, %v53, 0
    %v120 = vsel %vm79, %v54, 0
    %v123 = vsel %vm79, %v55, 0
    %v126 = vsel %vm79, %v56, 0
    %v129 = vsel %vm79, %v57, 0
    %v132 = vsel %vm79, %v58, 0
    %v135 = vsel %vm79, %v59, 0
    %v138 = vsel %vm79, %v60, 0
    %v141 = vsel %vm79, %v61, 0
    %v144 = vsel %vm79, %v62, 0
    %v147 = vsel %vm79, %v63, 0
    %v150 = vsel %vm79, %v64, 0
    %v153 = vsel %vm79, %v65, 0
    %v156 = vsel %vm79, %v66, 0
    %158 = vmatprep.subr.mxu0 0.0
    %159 = vmatpush1.xpose.msra.mxu0 %v129
    %160 = vmatprep.subr.mxu0 0.0
    %161 = vmatpush1.xpose.msra.mxu0 %v126
    %162 = vmatprep.subr.mxu0 0.0
    %163 = vmatpush1.xpose.msra.mxu0 %v123
    %164 = vmatprep.subr.mxu0 0.0
    %165 = vmatpush1.xpose.msra.mxu0 %v120
    %166 = vmatprep.subr.mxu0 0.0
    %167 = vmatpush1.xpose.msra.mxu0 %v117
    %168 = vmatprep.subr.mxu0 0.0
    %169 = vmatpush1.xpose.msra.mxu0 %v114
    %170 = vmatprep.subr.mxu0 0.0
    %171 = vmatpush1.xpose.msra.mxu0 %v111
    %172 = vmatprep.subr.mxu0 0.0
    %173 = vmatpush1.xpose.msra.mxu0 %v108
    %174 = vmatprep.subr.mxu0 0.0
    %175 = vmatpush1.xpose.msra.mxu0 %v105
    %176 = vmatprep.subr.mxu0 0.0
    %177 = vmatpush1.xpose.msra.mxu0 %v102
    %178 = vmatprep.subr.mxu0 0.0
    %179 = vmatpush1.xpose.msra.mxu0 %v99
    %180 = vmatprep.subr.mxu0 0.0
    %181 = vmatpush1.xpose.msra.mxu0 %v96
    %182 = vmatprep.subr.mxu0 0.0
    %183 = vmatpush1.xpose.msra.mxu0 %v93
    %184 = vmatprep.subr.mxu0 0.0
    %185 = vmatpush1.xpose.msra.mxu0 %v90
    %186 = vmatprep.subr.mxu0 0.0
    %187 = vmatpush1.xpose.msra.mxu0 %v87
    %188 = vmatprep.subr.mxu0 0.0
    %189 = vmatpush1.xpose.msra.mxu0 %v84
    %190 = vmatprep.subr.mxu0 0.0
    %191 = vmatpush2.xpose.msra.mxu0 0.0
    %192 = vmatprep.subr.mxu0 0.0
    %193 = vmatpush2.xpose.msra.mxu0 0.0
    %194 = vmatprep.subr.mxu0 0.0
    %195 = vmatpush2.xpose.msra.mxu0 0.0
    %196 = vmatprep.subr.mxu0 0.0
    %197 = vmatpush2.xpose.msra.mxu0 0.0
    %198 = vmatprep.subr.mxu0 0.0
    %199 = vmatpush2.xpose.msra.mxu0 0.0
    %200 = vmatprep.subr.mxu0 0.0
    %201 = vmatpush2.xpose.msra.mxu0 0.0
    %202 = vmatprep.subr.mxu0 0.0
    %203 = vmatpush2.xpose.msra.mxu0 0.0
    %204 = vmatprep.subr.mxu0 0.0
    %205 = vmatpush2.xpose.msra.mxu0 %v156
    %206 = vmatprep.subr.mxu0 0.0
    %207 = vmatpush2.xpose.msra.mxu0 %v153
    %208 = vmatprep.subr.mxu0 0.0
    %209 = vmatpush2.xpose.msra.mxu0 %v150
    %210 = vmatprep.subr.mxu0 0.0
    %211 = vmatpush2.xpose.msra.mxu0 %v147
    %212 = vmatprep.subr.mxu0 0.0
    %213 = vmatpush2.xpose.msra.mxu0 %v144
    %214 = vmatprep.subr.mxu0 0.0
    %215 = vmatpush2.xpose.msra.mxu0 %v141
    %216 = vmatprep.subr.mxu0 0.0
    %217 = vmatpush2.xpose.msra.mxu0 %v138
    %218 = vmatprep.subr.mxu0 0.0
    %219 = vmatpush2.xpose.msra.mxu0 %v135
    %220 = vmatprep.subr.mxu0 0.0
    %221 = vmatpush2.xpose.msra.mxu0 %v132
    %222 = vmatprep.mubr.f32.mxu0 0.0
    %223 = vmatmul.mubr.f32.gmra.mxu0 %v81
    %v224 = vpop.f32.mrf.mxu0
    %v225 = vadd.f32 %v72, %v224
    %v226 = vpop.f32.mrf.mxu0
    %v227 = vadd.f32 %v76, %v226
    %228 = vdwg.mxu0
    %v229 = vmul.f32 %v225, 0.5
    %v230 = vmul.f32 %v227, 0.5
    %v231 = vmul.f32 %v225, 0.044715
    %v232 = vmul.f32 %v227, 0.044715
    %v233 = vmul.f32 %v231, %v225
    %v234 = vmul.f32 %v232, %v227
    %v235 = vmul.f32 %v233, %v225
    %v236 = vmul.f32 %v234, %v227
    %v237 = vadd.f32 %v225, %v235
    %v238 = vadd.f32 %v227, %v236
    %v239 = vmul.f32 %v237, 0.7978846
    %v240 = vmul.f32 %v238, 0.7978846
    %v241 = vtanh.pop %v239
    %v242 = vtanh.pop %v240
    %v243 = vadd.f32 %v241, 1.0
    %v244 = vadd.f32 %v242, 1.0
    %v245 = vmul.f32 %v229, %v243
    %v246 = vmul.f32 %v230, %v244
    %v247 = vld [vmem:[#allocation2] sm:$0xff]
    %v248 = vld [vmem:[#allocation2 + $0x8] sm:$0xff]
    %v249 = vld [vmem:[#allocation2 + $0x10] sm:$0xff]
    %v250 = vld [vmem:[#allocation2 + $0x18] sm:$0xff]
    %v251 = vld [vmem:[#allocation2 + $0x20] sm:$0xff]
    %v252 = vld [vmem:[#allocation2 + $0x28] sm:$0xff]
    %v253 = vld [vmem:[#allocation2 + $0x30] sm:$0xff]
    %v254 = vld [vmem:[#allocation2 + $0x38] sm:$0xff]
    %v255 = vld [vmem:[#allocation2 + $0x40] sm:$0xff]
    %v256 = vld [vmem:[#allocation2 + $0x48] sm:$0xff]
    %v257 = vld [vmem:[#allocation2 + $0x50] sm:$0xff]
    %v258 = vld [vmem:[#allocation2 + $0x58] sm:$0xff]
    %v259 = vld [vmem:[#allocation2 + $0x60] sm:$0xff]
    %v260 = vld [vmem:[#allocation2 + $0x68] sm:$0xff]
    %v261 = vld [vmem:[#allocation2 + $0x70] sm:$0xff]
    %v262 = vld [vmem:[#allocation2 + $0x78] sm:$0xff]
    %v263 = vld [vmem:[#allocation2 + $0x80] sm:$0xff]
    %v264 = vld [vmem:[#allocation2 + $0x88] sm:$0xff]
    %v265 = vld [vmem:[#allocation2 + $0x90] sm:$0xff]
    %v266 = vld [vmem:[#allocation2 + $0x98] sm:$0xff]
    %v267 = vld [vmem:[#allocation2 + $0xa0] sm:$0xff]
    %v268 = vld [vmem:[#allocation2 + $0xa8] sm:$0xff]
    %v269 = vld [vmem:[#allocation2 + $0xb0] sm:$0xff]
    %v270 = vld [vmem:[#allocation2 + $0xb8] sm:$0xff]
    %v271 = vld [vmem:[#allocation2 + $0xc0] sm:$0xff]
    %v272 = vld [vmem:[#allocation2 + $0xc8] sm:$0xff]
    %v273 = vld [vmem:[#allocation2 + $0xd0] sm:$0xff]
    %v274 = vld [vmem:[#allocation2 + $0xd8] sm:$0xff]
    %v275 = vld [vmem:[#allocation2 + $0xe0] sm:$0xff]
    %v276 = vld [vmem:[#allocation2 + $0xe8] sm:$0xff]
    %v277 = vld [vmem:[#allocation2 + $0xf0] sm:$0xff]
    %v278 = vld [vmem:[#allocation2 + $0xf8] sm:$0xff]
    %v279 = vld [vmem:[#allocation2 + $0x100] sm:$0xff]
    %v280 = vld [vmem:[#allocation2 + $0x108] sm:$0xff]
    %v281 = vld [vmem:[#allocation2 + $0x110] sm:$0xff]
    %v282 = vld [vmem:[#allocation2 + $0x118] sm:$0xff]
    %v283 = vld [vmem:[#allocation2 + $0x120] sm:$0xff]
    %v284 = vld [vmem:[#allocation2 + $0x128] sm:$0xff]
    %v285 = vld [vmem:[#allocation2 + $0x130] sm:$0xff]
    %v286 = vld [vmem:[#allocation2 + $0x138] sm:$0xff]
    %v287 = vld [vmem:[#allocation2 + $0x140] sm:$0xff]
    %v288 = vld [vmem:[#allocation2 + $0x148] sm:$0xff]
    %v289 = vld [vmem:[#allocation2 + $0x150] sm:$0xff]
    %v290 = vld [vmem:[#allocation2 + $0x158] sm:$0xff]
    %v291 = vld [vmem:[#allocation2 + $0x160] sm:$0xff]
    %v292 = vld [vmem:[#allocation2 + $0x168] sm:$0xff]
    %v293 = vld [vmem:[#allocation2 + $0x170] sm:$0xff]
    %v294 = vld [vmem:[#allocation2 + $0x178] sm:$0xff]
    %v295 = vld [vmem:[#allocation2 + $0x180] sm:$0xff]
    %v296 = vld [vmem:[#allocation2 + $0x188] sm:$0xff]
    %v297 = vld [vmem:[%s4] sm:$0x3]
    %v299 = vlaneseq
    %v300 = vshrl.u32 %v299, 7
    %v301 = vsub.s32 0, %v300
    %v302 = vrot.slane %v297, %v301
    %v303 = vlaneseq
    %v304 = vshrl.u32 %v303, 7
    %v305 = vsub.s32 1, %v304
    %v306 = vrot.slane %v297, %v305
    %vm309 = vcmask 588800
    %v311 = vsel %vm309, %v246, 0
    %v314 = vsel %vm309, %v248, 0
    %v317 = vsel %vm309, %v250, 0
    %v320 = vsel %vm309, %v252, 0
    %v323 = vsel %vm309, %v254, 0
    %v326 = vsel %vm309, %v256, 0
    %v329 = vsel %vm309, %v258, 0
    %v332 = vsel %vm309, %v260, 0
    %v335 = vsel %vm309, %v262, 0
    %v338 = vsel %vm309, %v264, 0
    %v341 = vsel %vm309, %v266, 0
    %v344 = vsel %vm309, %v268, 0
    %v347 = vsel %vm309, %v270, 0
    %v350 = vsel %vm309, %v272, 0
    %v353 = vsel %vm309, %v274, 0
    %v356 = vsel %vm309, %v276, 0
    %v359 = vsel %vm309, %v278, 0
    %v362 = vsel %vm309, %v280, 0
    %v365 = vsel %vm309, %v282, 0
    %v368 = vsel %vm309, %v284, 0
    %v371 = vsel %vm309, %v286, 0
    %v374 = vsel %vm309, %v288, 0
    %v377 = vsel %vm309, %v290, 0
    %v380 = vsel %vm309, %v292, 0
    %v383 = vsel %vm309, %v294, 0
    %v386 = vsel %vm309, %v296, 0
    %388 = vmatprep.subr.mxu0 %v359
    %389 = vmatpush1.xpose.msra.mxu0 %v277
    %390 = vmatprep.subr.mxu0 %v356
    %391 = vmatpush1.xpose.msra.mxu0 %v275
    %392 = vmatprep.subr.mxu0 %v353
    %393 = vmatpush1.xpose.msra.mxu0 %v273
    %394 = vmatprep.subr.mxu0 %v350
    %395 = vmatpush1.xpose.msra.mxu0 %v271
    %396 = vmatprep.subr.mxu0 %v347
    %397 = vmatpush1.xpose.msra.mxu0 %v269
    %398 = vmatprep.subr.mxu0 %v344
    %399 = vmatpush1.xpose.msra.mxu0 %v267
    %400 = vmatprep.subr.mxu0 %v341
    %401 = vmatpush1.xpose.msra.mxu0 %v265
    %402 = vmatprep.subr.mxu0 %v338
    %403 = vmatpush1.xpose.msra.mxu0 %v263
    %404 = vmatprep.subr.mxu0 %v335
    %405 = vmatpush1.xpose.msra.mxu0 %v261
    %406 = vmatprep.subr.mxu0 %v332
    %407 = vmatpush1.xpose.msra.mxu0 %v259
    %408 = vmatprep.subr.mxu0 %v329
    %409 = vmatpush1.xpose.msra.mxu0 %v257
    %410 = vmatprep.subr.mxu0 %v326
    %411 = vmatpush1.xpose.msra.mxu0 %v255
    %412 = vmatprep.subr.mxu0 %v323
    %413 = vmatpush1.xpose.msra.mxu0 %v253
    %414 = vmatprep.subr.mxu0 %v320
    %415 = vmatpush1.xpose.msra.mxu0 %v251
    %416 = vmatprep.subr.mxu0 %v317
    %417 = vmatpush1.xpose.msra.mxu0 %v249
    %418 = vmatprep.subr.mxu0 %v314
    %419 = vmatpush1.xpose.msra.mxu0 %v247
    %420 = vmatprep.subr.mxu0 0.0
    %421 = vmatpush2.xpose.msra.mxu0 0.0
    %422 = vmatprep.subr.mxu0 0.0
    %423 = vmatpush2.xpose.msra.mxu0 0.0
    %424 = vmatprep.subr.mxu0 0.0
    %425 = vmatpush2.xpose.msra.mxu0 0.0
    %426 = vmatprep.subr.mxu0 0.0
    %427 = vmatpush2.xpose.msra.mxu0 0.0
    %428 = vmatprep.subr.mxu0 0.0
    %429 = vmatpush2.xpose.msra.mxu0 0.0
    %430 = vmatprep.subr.mxu0 0.0
    %431 = vmatpush2.xpose.msra.mxu0 0.0
    %432 = vmatprep.subr.mxu0 0.0
    %433 = vmatpush2.xpose.msra.mxu0 0.0
    %434 = vmatprep.subr.mxu0 %v386
    %435 = vmatpush2.xpose.msra.mxu0 %v295
    %436 = vmatprep.subr.mxu0 %v383
    %437 = vmatpush2.xpose.msra.mxu0 %v293
    %438 = vmatprep.subr.mxu0 %v380
    %439 = vmatpush2.xpose.msra.mxu0 %v291
    %440 = vmatprep.subr.mxu0 %v377
    %441 = vmatpush2.xpose.msra.mxu0 %v289
    %442 = vmatprep.subr.mxu0 %v374
    %443 = vmatpush2.xpose.msra.mxu0 %v287
    %444 = vmatprep.subr.mxu0 %v371
    %445 = vmatpush2.xpose.msra.mxu0 %v285
    %446 = vmatprep.subr.mxu0 %v368
    %447 = vmatpush2.xpose.msra.mxu0 %v283
    %448 = vmatprep.subr.mxu0 %v365
    %449 = vmatpush2.xpose.msra.mxu0 %v281
    %450 = vmatprep.subr.mxu0 %v362
    %451 = vmatpush2.xpose.msra.mxu0 %v279
    %452 = vmatprep.mubr.f32.mxu0 %v311
    %453 = vmatmul.mubr.f32.gmra.mxu0 %v245
    %v454 = vpop.f32.mrf.mxu0
    %v455 = vadd.f32 %v302, %v454
    %v456 = vpop.f32.mrf.mxu0
    %v457 = vadd.f32 %v306, %v456
    %458 = vdwg.mxu0
    %v459 = vmul.f32 %v455, 0.5
    %v460 = vmul.f32 %v457, 0.5
    %v461 = vmul.f32 %v455, 0.044715
    %v462 = vmul.f32 %v457, 0.044715
    %v463 = vmul.f32 %v461, %v455
    %v464 = vmul.f32 %v462, %v457
    %v465 = vmul.f32 %v463, %v455
    %v466 = vmul.f32 %v464, %v457
    %v467 = vadd.f32 %v455, %v465
    %v468 = vadd.f32 %v457, %v466
    %v469 = vmul.f32 %v467, 0.7978846
    %v470 = vmul.f32 %v468, 0.7978846
    %v471 = vtanh.pop %v469
    %v472 = vtanh.pop %v470
    %v473 = vadd.f32 %v471, 1.0
    %v474 = vadd.f32 %v472, 1.0
    %v475 = vmul.f32 %v459, %v473
    %v476 = vmul.f32 %v460, %v474
    %v477 = vadd.f32 %v245, %v475
    %v478 = vadd.f32 %v246, %v476
    %s479 = scalar_lea.vmem [#allocation2], 400
    %v480 = vld [vmem:[%s479] sm:$0xff]
    %v481 = vld [vmem:[%s479 + $0x8] sm:$0xff]
    %v482 = vld [vmem:[%s479 + $0x10] sm:$0xff]
    %v483 = vld [vmem:[%s479 + $0x18] sm:$0xff]
    %v484 = vld [vmem:[%s479 + $0x20] sm:$0xff]
    %v485 = vld [vmem:[%s479 + $0x28] sm:$0xff]
    %v486 = vld [vmem:[%s479 + $0x30] sm:$0xff]
    %v487 = vld [vmem:[%s479 + $0x38] sm:$0xff]
    %v488 = vld [vmem:[%s479 + $0x40] sm:$0xff]
    %v489 = vld [vmem:[%s479 + $0x48] sm:$0xff]
    %v490 = vld [vmem:[%s479 + $0x50] sm:$0xff]
    %v491 = vld [vmem:[%s479 + $0x58] sm:$0xff]
    %v492 = vld [vmem:[%s479 + $0x60] sm:$0xff]
    %v493 = vld [vmem:[%s479 + $0x68] sm:$0xff]
    %v494 = vld [vmem:[%s479 + $0x70] sm:$0xff]
    %v495 = vld [vmem:[%s479 + $0x78] sm:$0xff]
    %v496 = vld [vmem:[%s479 + $0x80] sm:$0xff]
    %v497 = vld [vmem:[%s479 + $0x88] sm:$0xff]
    %v498 = vld [vmem:[%s479 + $0x90] sm:$0xff]
    %v499 = vld [vmem:[%s479 + $0x98] sm:$0xff]
    %v500 = vld [vmem:[%s479 + $0xa0] sm:$0xff]
    %v501 = vld [vmem:[%s479 + $0xa8] sm:$0xff]
    %v502 = vld [vmem:[%s479 + $0xb0] sm:$0xff]
    %v503 = vld [vmem:[%s479 + $0xb8] sm:$0xff]
    %v504 = vld [vmem:[%s479 + $0xc0] sm:$0xff]
    %v505 = vld [vmem:[%s479 + $0xc8] sm:$0xff]
    %v506 = vld [vmem:[%s479 + $0xd0] sm:$0xff]
    %v507 = vld [vmem:[%s479 + $0xd8] sm:$0xff]
    %v508 = vld [vmem:[%s479 + $0xe0] sm:$0xff]
    %v509 = vld [vmem:[%s479 + $0xe8] sm:$0xff]
    %v510 = vld [vmem:[%s479 + $0xf0] sm:$0xff]
    %v511 = vld [vmem:[%s479 + $0xf8] sm:$0xff]
    %v512 = vld [vmem:[%s479 + $0x100] sm:$0xff]
    %v513 = vld [vmem:[%s479 + $0x108] sm:$0xff]
    %v514 = vld [vmem:[%s479 + $0x110] sm:$0xff]
    %v515 = vld [vmem:[%s479 + $0x118] sm:$0xff]
    %v516 = vld [vmem:[%s479 + $0x120] sm:$0xff]
    %v517 = vld [vmem:[%s479 + $0x128] sm:$0xff]
    %v518 = vld [vmem:[%s479 + $0x130] sm:$0xff]
    %v519 = vld [vmem:[%s479 + $0x138] sm:$0xff]
    %v520 = vld [vmem:[%s479 + $0x140] sm:$0xff]
    %v521 = vld [vmem:[%s479 + $0x148] sm:$0xff]
    %v522 = vld [vmem:[%s479 + $0x150] sm:$0xff]
    %v523 = vld [vmem:[%s479 + $0x158] sm:$0xff]
    %v524 = vld [vmem:[%s479 + $0x160] sm:$0xff]
    %v525 = vld [vmem:[%s479 + $0x168] sm:$0xff]
    %v526 = vld [vmem:[%s479 + $0x170] sm:$0xff]
    %v527 = vld [vmem:[%s479 + $0x178] sm:$0xff]
    %v528 = vld [vmem:[%s479 + $0x180] sm:$0xff]
    %v529 = vld [vmem:[%s479 + $0x188] sm:$0xff]
    %s530 = scalar_lea.vmem %s4, 2
    %v531 = vld [vmem:[%s530] sm:$0x3]
    %v533 = vlaneseq
    %v534 = vshrl.u32 %v533, 7
    %v535 = vsub.s32 0, %v534
    %v536 = vrot.slane %v531, %v535
    %v537 = vlaneseq
    %v538 = vshrl.u32 %v537, 7
    %v539 = vsub.s32 1, %v538
    %v540 = vrot.slane %v531, %v539
    %v544 = vsel %vm309, %v478, 0
    %v547 = vsel %vm309, %v481, 0
    %v550 = vsel %vm309, %v483, 0
    %v553 = vsel %vm309, %v485, 0
    %v556 = vsel %vm309, %v487, 0
    %v559 = vsel %vm309, %v489, 0
    %v562 = vsel %vm309, %v491, 0
    %v565 = vsel %vm309, %v493, 0
    %v568 = vsel %vm309, %v495, 0
    %v571 = vsel %vm309, %v497, 0
    %v574 = vsel %vm309, %v499, 0
    %v577 = vsel %vm309, %v501, 0
    %v580 = vsel %vm309, %v503, 0
    %v583 = vsel %vm309, %v505, 0
    %v586 = vsel %vm309, %v507, 0
    %v589 = vsel %vm309, %v509, 0
    %v592 = vsel %vm309, %v511, 0
    %v595 = vsel %vm309, %v513, 0
    %v598 = vsel %vm309, %v515, 0
    %v601 = vsel %vm309, %v517, 0
    %v604 = vsel %vm309, %v519, 0
    %v607 = vsel %vm309, %v521, 0
    %v610 = vsel %vm309, %v523, 0
    %v613 = vsel %vm309, %v525, 0
    %v616 = vsel %vm309, %v527, 0
    %v619 = vsel %vm309, %v529, 0
    %621 = vmatprep.subr.mxu0 %v592
    %622 = vmatpush1.xpose.msra.mxu0 %v510
    %623 = vmatprep.subr.mxu0 %v589
    %624 = vmatpush1.xpose.msra.mxu0 %v508
    %625 = vmatprep.subr.mxu0 %v586
    %626 = vmatpush1.xpose.msra.mxu0 %v506
    %627 = vmatprep.subr.mxu0 %v583
    %628 = vmatpush1.xpose.msra.mxu0 %v504
    %629 = vmatprep.subr.mxu0 %v580
    %630 = vmatpush1.xpose.msra.mxu0 %v502
    %631 = vmatprep.subr.mxu0 %v577
    %632 = vmatpush1.xpose.msra.mxu0 %v500
    %633 = vmatprep.subr.mxu0 %v574
    %634 = vmatpush1.xpose.msra.mxu0 %v498
    %635 = vmatprep.subr.mxu0 %v571
    %636 = vmatpush1.xpose.msra.mxu0 %v496
    %637 = vmatprep.subr.mxu0 %v568
    %638 = vmatpush1.xpose.msra.mxu0 %v494
    %639 = vmatprep.subr.mxu0 %v565
    %640 = vmatpush1.xpose.msra.mxu0 %v492
    %641 = vmatprep.subr.mxu0 %v562
    %642 = vmatpush1.xpose.msra.mxu0 %v490
    %643 = vmatprep.subr.mxu0 %v559
    %644 = vmatpush1.xpose.msra.mxu0 %v488
    %645 = vmatprep.subr.mxu0 %v556
    %646 = vmatpush1.xpose.msra.mxu0 %v486
    %647 = vmatprep.subr.mxu0 %v553
    %648 = vmatpush1.xpose.msra.mxu0 %v484
    %649 = vmatprep.subr.mxu0 %v550
    %650 = vmatpush1.xpose.msra.mxu0 %v482
    %651 = vmatprep.subr.mxu0 %v547
    %652 = vmatpush1.xpose.msra.mxu0 %v480
    %653 = vmatprep.subr.mxu0 0.0
    %654 = vmatpush2.xpose.msra.mxu0 0.0
    %655 = vmatprep.subr.mxu0 0.0
    %656 = vmatpush2.xpose.msra.mxu0 0.0
    %657 = vmatprep.subr.mxu0 0.0
    %658 = vmatpush2.xpose.msra.mxu0 0.0
    %659 = vmatprep.subr.mxu0 0.0
    %660 = vmatpush2.xpose.msra.mxu0 0.0
    %661 = vmatprep.subr.mxu0 0.0
    %662 = vmatpush2.xpose.msra.mxu0 0.0
    %663 = vmatprep.subr.mxu0 0.0
    %664 = vmatpush2.xpose.msra.mxu0 0.0
    %665 = vmatprep.subr.mxu0 0.0
    %666 = vmatpush2.xpose.msra.mxu0 0.0
    %667 = vmatprep.subr.mxu0 %v619
    %668 = vmatpush2.xpose.msra.mxu0 %v528
    %669 = vmatprep.subr.mxu0 %v616
    %670 = vmatpush2.xpose.msra.mxu0 %v526
    %671 = vmatprep.subr.mxu0 %v613
    %672 = vmatpush2.xpose.msra.mxu0 %v524
    %673 = vmatprep.subr.mxu0 %v610
    %674 = vmatpush2.xpose.msra.mxu0 %v522
    %675 = vmatprep.subr.mxu0 %v607
    %676 = vmatpush2.xpose.msra.mxu0 %v520
    %677 = vmatprep.subr.mxu0 %v604
    %678 = vmatpush2.xpose.msra.mxu0 %v518
    %679 = vmatprep.subr.mxu0 %v601
    %680 = vmatpush2.xpose.msra.mxu0 %v516
    %681 = vmatprep.subr.mxu0 %v598
    %682 = vmatpush2.xpose.msra.mxu0 %v514
    %683 = vmatprep.subr.mxu0 %v595
    %684 = vmatpush2.xpose.msra.mxu0 %v512
    %685 = vmatprep.mubr.f32.mxu0 %v544
    %686 = vmatmul.mubr.f32.gmra.mxu0 %v477
    %v687 = vpop.f32.mrf.mxu0
    %v688 = vadd.f32 %v536, %v687
    %v689 = vpop.f32.mrf.mxu0
    %v690 = vadd.f32 %v540, %v689
    %691 = vdwg.mxu0
    %v692 = vmul.f32 %v688, 0.5
    %v693 = vmul.f32 %v690, 0.5
    %v694 = vmul.f32 %v688, 0.044715
    %v695 = vmul.f32 %v690, 0.044715
    %v696 = vmul.f32 %v694, %v688
    %v697 = vmul.f32 %v695, %v690
    %v698 = vmul.f32 %v696, %v688
    %v699 = vmul.f32 %v697, %v690
    %v700 = vadd.f32 %v688, %v698
    %v701 = vadd.f32 %v690, %v699
    %v702 = vmul.f32 %v700, 0.7978846
    %v703 = vmul.f32 %v701, 0.7978846
    %v704 = vtanh.pop %v702
    %v705 = vtanh.pop %v703
    %v706 = vadd.f32 %v704, 1.0
    %v707 = vadd.f32 %v705, 1.0
    %v708 = vmul.f32 %v692, %v706
    %v709 = vmul.f32 %v693, %v707
    %v710 = vadd.f32 %v477, %v708
    %v711 = vadd.f32 %v478, %v709
    %s712 = scalar_lea.vmem [#allocation2], 800
    %v713 = vld [vmem:[%s712] sm:$0xff]
    %v714 = vld [vmem:[%s712 + $0x8] sm:$0xff]
    %v715 = vld [vmem:[%s712 + $0x10] sm:$0xff]
    %v716 = vld [vmem:[%s712 + $0x18] sm:$0xff]
    %v717 = vld [vmem:[%s712 + $0x20] sm:$0xff]
    %v718 = vld [vmem:[%s712 + $0x28] sm:$0xff]
    %v719 = vld [vmem:[%s712 + $0x30] sm:$0xff]
    %v720 = vld [vmem:[%s712 + $0x38] sm:$0xff]
    %v721 = vld [vmem:[%s712 + $0x40] sm:$0xff]
    %v722 = vld [vmem:[%s712 + $0x48] sm:$0xff]
    %v723 = vld [vmem:[%s712 + $0x50] sm:$0xff]
    %v724 = vld [vmem:[%s712 + $0x58] sm:$0xff]
    %v725 = vld [vmem:[%s712 + $0x60] sm:$0xff]
    %v726 = vld [vmem:[%s712 + $0x68] sm:$0xff]
    %v727 = vld [vmem:[%s712 + $0x70] sm:$0xff]
    %v728 = vld [vmem:[%s712 + $0x78] sm:$0xff]
    %v729 = vld [vmem:[%s712 + $0x80] sm:$0xff]
    %v730 = vld [vmem:[%s712 + $0x88] sm:$0xff]
    %v731 = vld [vmem:[%s712 + $0x90] sm:$0xff]
    %v732 = vld [vmem:[%s712 + $0x98] sm:$0xff]
    %v733 = vld [vmem:[%s712 + $0xa0] sm:$0xff]
    %v734 = vld [vmem:[%s712 + $0xa8] sm:$0xff]
    %v735 = vld [vmem:[%s712 + $0xb0] sm:$0xff]
    %v736 = vld [vmem:[%s712 + $0xb8] sm:$0xff]
    %v737 = vld [vmem:[%s712 + $0xc0] sm:$0xff]
    %v738 = vld [vmem:[%s712 + $0xc8] sm:$0xff]
    %v739 = vld [vmem:[%s712 + $0xd0] sm:$0xff]
    %v740 = vld [vmem:[%s712 + $0xd8] sm:$0xff]
    %v741 = vld [vmem:[%s712 + $0xe0] sm:$0xff]
    %v742 = vld [vmem:[%s712 + $0xe8] sm:$0xff]
    %v743 = vld [vmem:[%s712 + $0xf0] sm:$0xff]
    %v744 = vld [vmem:[%s712 + $0xf8] sm:$0xff]
    %v745 = vld [vmem:[%s712 + $0x100] sm:$0xff]
    %v746 = vld [vmem:[%s712 + $0x108] sm:$0xff]
    %v747 = vld [vmem:[%s712 + $0x110] sm:$0xff]
    %v748 = vld [vmem:[%s712 + $0x118] sm:$0xff]
    %v749 = vld [vmem:[%s712 + $0x120] sm:$0xff]
    %v750 = vld [vmem:[%s712 + $0x128] sm:$0xff]
    %v751 = vld [vmem:[%s712 + $0x130] sm:$0xff]
    %v752 = vld [vmem:[%s712 + $0x138] sm:$0xff]
    %v753 = vld [vmem:[%s712 + $0x140] sm:$0xff]
    %v754 = vld [vmem:[%s712 + $0x148] sm:$0xff]
    %v755 = vld [vmem:[%s712 + $0x150] sm:$0xff]
    %v756 = vld [vmem:[%s712 + $0x158] sm:$0xff]
    %v757 = vld [vmem:[%s712 + $0x160] sm:$0xff]
    %v758 = vld [vmem:[%s712 + $0x168] sm:$0xff]
    %v759 = vld [vmem:[%s712 + $0x170] sm:$0xff]
    %v760 = vld [vmem:[%s712 + $0x178] sm:$0xff]
    %v761 = vld [vmem:[%s712 + $0x180] sm:$0xff]
    %v762 = vld [vmem:[%s712 + $0x188] sm:$0xff]
    %s763 = scalar_lea.vmem %s4, 4
    %v764 = vld [vmem:[%s763] sm:$0x3]
    %v766 = vlaneseq
    %v767 = vshrl.u32 %v766, 7
    %v768 = vsub.s32 0, %v767
    %v769 = vrot.slane %v764, %v768
    %v770 = vlaneseq
    %v771 = vshrl.u32 %v770, 7
    %v772 = vsub.s32 1, %v771
    %v773 = vrot.slane %v764, %v772
    %v777 = vsel %vm309, %v711, 0
    %v780 = vsel %vm309, %v714, 0
    %v783 = vsel %vm309, %v716, 0
    %v786 = vsel %vm309, %v718, 0
    %v789 = vsel %vm309, %v720, 0
    %v792 = vsel %vm309, %v722, 0
    %v795 = vsel %vm309, %v724, 0
    %v798 = vsel %vm309, %v726, 0
    %v801 = vsel %vm309, %v728, 0
    %v804 = vsel %vm309, %v730, 0
    %v807 = vsel %vm309, %v732, 0
    %v810 = vsel %vm309, %v734, 0
    %v813 = vsel %vm309, %v736, 0
    %v816 = vsel %vm309, %v738, 0
    %v819 = vsel %vm309, %v740, 0
    %v822 = vsel %vm309, %v742, 0
    %v825 = vsel %vm309, %v744, 0
    %v828 = vsel %vm309, %v746, 0
    %v831 = vsel %vm309, %v748, 0
    %v834 = vsel %vm309, %v750, 0
    %v837 = vsel %vm309, %v752, 0
    %v840 = vsel %vm309, %v754, 0
    %v843 = vsel %vm309, %v756, 0
    %v846 = vsel %vm309, %v758, 0
    %v849 = vsel %vm309, %v760, 0
    %v852 = vsel %vm309, %v762, 0
    %854 = vmatprep.subr.mxu0 %v825
    %855 = vmatpush1.xpose.msra.mxu0 %v743
    %856 = vmatprep.subr.mxu0 %v822
    %857 = vmatpush1.xpose.msra.mxu0 %v741
    %858 = vmatprep.subr.mxu0 %v819
    %859 = vmatpush1.xpose.msra.mxu0 %v739
    %860 = vmatprep.subr.mxu0 %v816
    %861 = vmatpush1.xpose.msra.mxu0 %v737
    %862 = vmatprep.subr.mxu0 %v813
    %863 = vmatpush1.xpose.msra.mxu0 %v735
    %864 = vmatprep.subr.mxu0 %v810
    %865 = vmatpush1.xpose.msra.mxu0 %v733
    %866 = vmatprep.subr.mxu0 %v807
    %867 = vmatpush1.xpose.msra.mxu0 %v731
    %868 = vmatprep.subr.mxu0 %v804
    %869 = vmatpush1.xpose.msra.mxu0 %v729
    %870 = vmatprep.subr.mxu0 %v801
    %871 = vmatpush1.xpose.msra.mxu0 %v727
    %872 = vmatprep.subr.mxu0 %v798
    %873 = vmatpush1.xpose.msra.mxu0 %v725
    %874 = vmatprep.subr.mxu0 %v795
    %875 = vmatpush1.xpose.msra.mxu0 %v723
    %876 = vmatprep.subr.mxu0 %v792
    %877 = vmatpush1.xpose.msra.mxu0 %v721
    %878 = vmatprep.subr.mxu0 %v789
    %879 = vmatpush1.xpose.msra.mxu0 %v719
    %880 = vmatprep.subr.mxu0 %v786
    %881 = vmatpush1.xpose.msra.mxu0 %v717
    %882 = vmatprep.subr.mxu0 %v783
    %883 = vmatpush1.xpose.msra.mxu0 %v715
    %884 = vmatprep.subr.mxu0 %v780
    %885 = vmatpush1.xpose.msra.mxu0 %v713
    %886 = vmatprep.subr.mxu0 0.0
    %887 = vmatpush2.xpose.msra.mxu0 0.0
    %888 = vmatprep.subr.mxu0 0.0
    %889 = vmatpush2.xpose.msra.mxu0 0.0
    %890 = vmatprep.subr.mxu0 0.0
    %891 = vmatpush2.xpose.msra.mxu0 0.0
    %892 = vmatprep.subr.mxu0 0.0
    %893 = vmatpush2.xpose.msra.mxu0 0.0
    %894 = vmatprep.subr.mxu0 0.0
    %895 = vmatpush2.xpose.msra.mxu0 0.0
    %896 = vmatprep.subr.mxu0 0.0
    %897 = vmatpush2.xpose.msra.mxu0 0.0
    %898 = vmatprep.subr.mxu0 0.0
    %899 = vmatpush2.xpose.msra.mxu0 0.0
    %900 = vmatprep.subr.mxu0 %v852
    %901 = vmatpush2.xpose.msra.mxu0 %v761
    %902 = vmatprep.subr.mxu0 %v849
    %903 = vmatpush2.xpose.msra.mxu0 %v759
    %904 = vmatprep.subr.mxu0 %v846
    %905 = vmatpush2.xpose.msra.mxu0 %v757
    %906 = vmatprep.subr.mxu0 %v843
    %907 = vmatpush2.xpose.msra.mxu0 %v755
    %908 = vmatprep.subr.mxu0 %v840
    %909 = vmatpush2.xpose.msra.mxu0 %v753
    %910 = vmatprep.subr.mxu0 %v837
    %911 = vmatpush2.xpose.msra.mxu0 %v751
    %912 = vmatprep.subr.mxu0 %v834
    %913 = vmatpush2.xpose.msra.mxu0 %v749
    %914 = vmatprep.subr.mxu0 %v831
    %915 = vmatpush2.xpose.msra.mxu0 %v747
    %916 = vmatprep.subr.mxu0 %v828
    %917 = vmatpush2.xpose.msra.mxu0 %v745
    %918 = vmatprep.mubr.f32.mxu0 %v777
    %919 = vmatmul.mubr.f32.gmra.mxu0 %v710
    %v920 = vpop.f32.mrf.mxu0
    %v921 = vadd.f32 %v769, %v920
    %v922 = vpop.f32.mrf.mxu0
    %v923 = vadd.f32 %v773, %v922
    %924 = vdwg.mxu0
    %v925 = vmul.f32 %v921, 0.5
    %v926 = vmul.f32 %v923, 0.5
    %v927 = vmul.f32 %v921, 0.044715
    %v928 = vmul.f32 %v923, 0.044715
    %v929 = vmul.f32 %v927, %v921
    %v930 = vmul.f32 %v928, %v923
    %v931 = vmul.f32 %v929, %v921
    %v932 = vmul.f32 %v930, %v923
    %v933 = vadd.f32 %v921, %v931
    %v934 = vadd.f32 %v923, %v932
    %v935 = vmul.f32 %v933, 0.7978846
    %v936 = vmul.f32 %v934, 0.7978846
    %v937 = vtanh.pop %v935
    %v938 = vtanh.pop %v936
    %v939 = vadd.f32 %v937, 1.0
    %v940 = vadd.f32 %v938, 1.0
    %v941 = vmul.f32 %v925, %v939
    %v942 = vmul.f32 %v926, %v940
    %v943 = vadd.f32 %v710, %v941
    %v944 = vadd.f32 %v711, %v942
    %v945 = vld [vmem:[%s5] sm:$0xff]
    %v946 = vld [vmem:[%s5 + $0x8] sm:$0xff]
    %v947 = vld [vmem:[%s5 + $0x10] sm:$0xff]
    %v948 = vld [vmem:[%s5 + $0x18] sm:$0xff]
    %v949 = vld [vmem:[%s5 + $0x20] sm:$0xff]
    %v950 = vld [vmem:[%s5 + $0x28] sm:$0xff]
    %v951 = vld [vmem:[%s5 + $0x30] sm:$0xff]
    %v952 = vld [vmem:[%s5 + $0x38] sm:$0xff]
    %v953 = vld [vmem:[%s5 + $0x40] sm:$0xff]
    %v954 = vld [vmem:[%s5 + $0x48] sm:$0xff]
    %v955 = vld [vmem:[%s5 + $0x50] sm:$0xff]
    %v956 = vld [vmem:[%s5 + $0x58] sm:$0xff]
    %v957 = vld [vmem:[%s5 + $0x60] sm:$0xff]
    %v958 = vld [vmem:[%s5 + $0x68] sm:$0xff]
    %v959 = vld [vmem:[%s5 + $0x70] sm:$0xff]
    %v960 = vld [vmem:[%s5 + $0x78] sm:$0xff]
    %v961 = vld [vmem:[%s5 + $0x80] sm:$0xff]
    %v962 = vld [vmem:[%s5 + $0x88] sm:$0xff]
    %v963 = vld [vmem:[%s5 + $0x90] sm:$0xff]
    %v964 = vld [vmem:[%s5 + $0x98] sm:$0xff]
    %v965 = vld [vmem:[%s5 + $0xa0] sm:$0xff]
    %v966 = vld [vmem:[%s5 + $0xa8] sm:$0xff]
    %v967 = vld [vmem:[%s5 + $0xb0] sm:$0xff]
    %v968 = vld [vmem:[%s5 + $0xb8] sm:$0xff]
    %v969 = vld [vmem:[%s5 + $0xc0] sm:$0xff]
    %v970 = vld [vmem:[%s5 + $0xc8] sm:$0xff]
    %v971 = vld [vmem:[%s5 + $0xd0] sm:$0xff]
    %v972 = vld [vmem:[%s5 + $0xd8] sm:$0xff]
    %v973 = vld [vmem:[%s5 + $0xe0] sm:$0xff]
    %v974 = vld [vmem:[%s5 + $0xe8] sm:$0xff]
    %v975 = vld [vmem:[%s5 + $0xf0] sm:$0xff]
    %v976 = vld [vmem:[%s5 + $0xf8] sm:$0xff]
    %v977 = vld [vmem:[%s6] sm:$0x1]
    %v979 = vlaneseq
    %v980 = vshrl.u32 %v979, 7
    %v981 = vsub.s32 0, %v980
    %v982 = vrot.slane %v977, %v981
    %v985 = vsel %vm309, %v944, 0
    %v988 = vsel %vm309, %v946, 0
    %v991 = vsel %vm309, %v948, 0
    %v994 = vsel %vm309, %v950, 0
    %v997 = vsel %vm309, %v952, 0
    %v1000 = vsel %vm309, %v954, 0
    %v1003 = vsel %vm309, %v956, 0
    %v1006 = vsel %vm309, %v958, 0
    %v1009 = vsel %vm309, %v960, 0
    %v1012 = vsel %vm309, %v962, 0
    %v1015 = vsel %vm309, %v964, 0
    %v1018 = vsel %vm309, %v966, 0
    %v1021 = vsel %vm309, %v968, 0
    %v1024 = vsel %vm309, %v970, 0
    %v1027 = vsel %vm309, %v972, 0
    %v1030 = vsel %vm309, %v974, 0
    %v1033 = vsel %vm309, %v976, 0
    %1035 = vmatprep.subr.mxu0 %v1033
    %1036 = vmatpush1.xpose.msra.mxu0 %v975
    %1037 = vmatprep.subr.mxu0 %v1030
    %1038 = vmatpush1.xpose.msra.mxu0 %v973
    %1039 = vmatprep.subr.mxu0 %v1027
    %1040 = vmatpush1.xpose.msra.mxu0 %v971
    %1041 = vmatprep.subr.mxu0 %v1024
    %1042 = vmatpush1.xpose.msra.mxu0 %v969
    %1043 = vmatprep.subr.mxu0 %v1021
    %1044 = vmatpush1.xpose.msra.mxu0 %v967
    %1045 = vmatprep.subr.mxu0 %v1018
    %1046 = vmatpush1.xpose.msra.mxu0 %v965
    %1047 = vmatprep.subr.mxu0 %v1015
    %1048 = vmatpush1.xpose.msra.mxu0 %v963
    %1049 = vmatprep.subr.mxu0 %v1012
    %1050 = vmatpush1.xpose.msra.mxu0 %v961
    %1051 = vmatprep.subr.mxu0 %v1009
    %1052 = vmatpush1.xpose.msra.mxu0 %v959
    %1053 = vmatprep.subr.mxu0 %v1006
    %1054 = vmatpush1.xpose.msra.mxu0 %v957
    %1055 = vmatprep.subr.mxu0 %v1003
    %1056 = vmatpush1.xpose.msra.mxu0 %v955
    %1057 = vmatprep.subr.mxu0 %v1000
    %1058 = vmatpush1.xpose.msra.mxu0 %v953
    %1059 = vmatprep.subr.mxu0 %v997
    %1060 = vmatpush1.xpose.msra.mxu0 %v951
    %1061 = vmatprep.subr.mxu0 %v994
    %1062 = vmatpush1.xpose.msra.mxu0 %v949
    %1063 = vmatprep.subr.mxu0 %v991
    %1064 = vmatpush1.xpose.msra.mxu0 %v947
    %1065 = vmatprep.subr.mxu0 %v988
    %1066 = vmatpush1.xpose.msra.mxu0 %v945
    %1067 = vmatprep.subr.mxu0 0.0
    %1068 = vmatpush2.xpose.msra.mxu0 0.0
    %1069 = vmatprep.subr.mxu0 0.0
    %1070 = vmatpush2.xpose.msra.mxu0 0.0
    %1071 = vmatprep.subr.mxu0 0.0
    %1072 = vmatpush2.xpose.msra.mxu0 0.0
    %1073 = vmatprep.subr.mxu0 0.0
    %1074 = vmatpush2.xpose.msra.mxu0 0.0
    %1075 = vmatprep.subr.mxu0 0.0
    %1076 = vmatpush2.xpose.msra.mxu0 0.0
    %1077 = vmatprep.subr.mxu0 0.0
    %1078 = vmatpush2.xpose.msra.mxu0 0.0
    %1079 = vmatprep.subr.mxu0 0.0
    %1080 = vmatpush2.xpose.msra.mxu0 0.0
    %1081 = vmatprep.subr.mxu0 0.0
    %1082 = vmatpush2.xpose.msra.mxu0 0.0
    %1083 = vmatprep.subr.mxu0 0.0
    %1084 = vmatpush2.xpose.msra.mxu0 0.0
    %1085 = vmatprep.subr.mxu0 0.0
    %1086 = vmatpush2.xpose.msra.mxu0 0.0
    %1087 = vmatprep.subr.mxu0 0.0
    %1088 = vmatpush2.xpose.msra.mxu0 0.0
    %1089 = vmatprep.subr.mxu0 0.0
    %1090 = vmatpush2.xpose.msra.mxu0 0.0
    %1091 = vmatprep.subr.mxu0 0.0
    %1092 = vmatpush2.xpose.msra.mxu0 0.0
    %1093 = vmatprep.subr.mxu0 0.0
    %1094 = vmatpush2.xpose.msra.mxu0 0.0
    %1095 = vmatprep.subr.mxu0 0.0
    %1096 = vmatpush2.xpose.msra.mxu0 0.0
    %1097 = vmatprep.subr.mxu0 0.0
    %1098 = vmatpush2.xpose.msra.mxu0 0.0
    %1099 = vmatprep.mubr.f32.mxu0 %v985
    %1100 = vmatmul.mubr.f32.gmra.mxu0 %v943
    %v1101 = vpop.f32.mrf.mxu0
    %v1102 = vadd.f32 %v982, %v1101
    %v1103 = vpop.f32.mrf.mxu0
    %1104 = vdwg.mxu0
    %1105 = vmax.xlane.f32.xlu0 %v1102
    %v1106 = vpop.xlane.xlu0 %1105
    %v1107 = vsub.f32 %v1102, %v1106
    %v1108 = vmul.f32 %v1107, 1.442695
    %v1109 = vpow.pop %v1108
    %1110 = vadd.xlane.f32.xlu0 %v1109
    %v1111 = vpop.xlane.xlu0 %1110
    %v1112 = vrcp.pop %v1111
    %v1113 = vmul.f32 %v1109, %v1112
    %1114 = vst [vmem:[#allocation5] sm:$0xff] %v1113
    // Predicated region
    $region34: #{tpu_custom_call.1} parent=1 // pred_check
      _
    $region35: #{tpu_custom_call.1} parent=1 // pred_check_branch
      %1116 = sbr.rel (0) target = $region37
    $region36: #{tpu_custom_call.1} parent=1 // pred_region
      %s1118 = ssub.s32 128, 128
      %1119 = vsyncadd [#allocation4], %s1118
      %s1121 = sshll.u32 [#allocation5], 4
      %s1122 = int_to_ptr.vmem [resolvable:$true] %s1121
      %1124 = dma.vmem_to_hbm [thread:$0]  %s1122, 128, %s7, [#allocation4]
    $region37: #{tpu_custom_call.1} parent=1 // pred_fallthru
      _
    // Predicated region
    $region38: #{tpu_custom_call.1} parent=1 // pred_check
      _
    $region39: #{tpu_custom_call.1} parent=1 // pred_check_branch
      %1126 = sbr.rel (0) target = $region41
    $region40: #{tpu_custom_call.1} parent=1 // pred_region
      %1127 = dma.done [#allocation4], 128
    $region41: #{tpu_custom_call.1} parent=1 // pred_fallthru
      _
    %1128 = vsyncpa [#allocation3], 1
    %1129 = vsyncpa [#allocation4], 1

</llo_original>
